<compile_context>
chip_gen: v6e
topology: v6e:2x2x1
jax: 0.10.0
libtpu: 0.0.40
codegen_flags: <defaults>
</compile_context>

<pallas_src>
import functools

import numpy as np

import jax
import jax.numpy as jnp
from jax.experimental import pallas as pl
from jax.experimental.pallas import tpu as pltpu

_LANE_QUANTUM = 384              # lcm(128 lane tiling, 3 interleaved channels)
_FAST_PATH_MAX_BYTES = 2 << 20   # below this, op-launch overhead dominates
_MIN_SPLIT_ELEMS = (512 * 1024) // 4  # keep blocks >= 512 KiB when splitting


# --------------------------------------------------------------------------
# Kernels
# --------------------------------------------------------------------------
def _weighted_sq_diff(pred, tgt, m0, a, b):
    """Per-element weighted squared error on one (bt, lt) channel-interleaved tile.

    m0 : (1, lt) 1.0 on channel-0 lanes, 0.0 elsewhere.
    a  : (1, lt) per-lane weight on object cells    = [1, l_coord, 1, ...]
    b  : (1, lt) per-lane weight on no-object cells = [l_noobj, 0, 0, ...]
    """
    # Broadcast each cell's channel-0 target (objectness) to its 3 lanes with
    # two XLU lane-rolls.  Lane tiles are channel-aligned (lt % 3 == 0), so the
    # roll wrap-around only ever reads zeroed (non-channel-0) lanes of t0m.
    t0m = tgt * m0
    t0 = t0m + pltpu.roll(t0m, shift=1, axis=1) + pltpu.roll(t0m, shift=2, axis=1)
    coo = (t0 > 0.5).astype(jnp.float32)
    noo = (t0 < 0.5).astype(jnp.float32)
    w = coo * a + noo * b            # loss coefficients folded into a, b
    d = pred - tgt
    return w * (d * d)


def _yolo_loss_single_kernel(pred_ref, tgt_ref, m0_ref, a_ref, b_ref, out_ref,
                             *, feature_length):
    """Single-block fast path: batch filter, weighted sum and normalization fused."""
    pred = pred_ref[...]
    tgt = tgt_ref[...]
    contrib = _weighted_sq_diff(pred, tgt, m0_ref[...], a_ref[...], b_ref[...])
    row_sum = jnp.sum(contrib, axis=1, keepdims=True)                  # (B, 1)
    bsel = (jnp.max(tgt, axis=1, keepdims=True) > 0.5).astype(jnp.float32)
    n_sel = jnp.sum(bsel)
    total = jnp.sum(bsel * row_sum)
    # TODO(synk): n_sel == 0 divides by zero (NaN/Inf), matching the reference
    # module's undefined behaviour when no batch row is selected.
    out_ref[0, 0] = total / (feature_length * n_sel)


def _yolo_loss_tiled_kernel(pred_ref, tgt_ref, m0_ref, a_ref, b_ref,
                            sum_ref, n_ref, acc_sum, acc_max):
    """Tiled path: grid (batch tiles [parallel], lane tiles [arbitrary]).

    Per-row (sum, max) accumulators live in VMEM scratch across lane tiles;
    the last lane tile applies the batch filter and emits one gated partial
    loss and one selected-row count per batch tile (SMEM scalars).
    """
    li = pl.program_id(1)

    @pl.when(li == 0)
    def _():
        acc_sum[...] = jnp.zeros_like(acc_sum)
        acc_max[...] = jnp.full_like(acc_max, -jnp.inf)

    pred = pred_ref[...]
    tgt = tgt_ref[...]
    contrib = _weighted_sq_diff(pred, tgt, m0_ref[...], a_ref[...], b_ref[...])
    acc_sum[...] += jnp.sum(contrib, axis=1, keepdims=True)            # (bt, 1)
    acc_max[...] = jnp.maximum(acc_max[...], jnp.max(tgt, axis=1, keepdims=True))

    @pl.when(li == pl.num_programs(1) - 1)
    def _():
        bsel = (acc_max[...] > 0.5).astype(jnp.float32)                # (bt, 1)
        sum_ref[0, 0] = jnp.sum(bsel * acc_sum[...])
        n_ref[0, 0] = jnp.sum(bsel)


# --------------------------------------------------------------------------
# Host-side helpers
# --------------------------------------------------------------------------
def _lane_consts(lt, l_coord, l_noobj):
    """Per-lane constants for the channel-interleaved [conf, loc, cls] layout."""
    reps = lt // 3
    m0 = np.tile(np.array([1.0, 0.0, 0.0], np.float32), reps)[None, :]
    a = np.tile(np.array([1.0, float(l_coord), 1.0], np.float32), reps)[None, :]
    b = np.tile(np.array([float(l_noobj), 0.0, 0.0], np.float32), reps)[None, :]
    return jnp.asarray(m0), jnp.asarray(a), jnp.asarray(b)


def _vmem_limit(block_bytes, vmem_cap):
    # ~2 streamed inputs x 2 buffers + roll/select temporaries + constants.
    want = 8 * block_bytes + (2 << 20)
    hi = min(int(0.9 * vmem_cap), 100 * 1024 * 1024)
    return int(min(max(want, 32 * 1024 * 1024), hi))


def _pick_tiles(B, w_total, max_block_elems):
    """Choose (batch_tile, lane_tile) dividing (B, w_total) within the budget."""
    # Batch-tile candidates: multiples of 8 that divide B, plus B itself
    # (a block dim must be a multiple of 8 or equal the full dim).
    bt_cands = [d for d in range(8, B + 1, 8) if B % d == 0]
    if B not in bt_cands:
        bt_cands.append(B)
    # Lane-tile candidates: channel-aligned (384 = lcm(128, 3)) divisors of the
    # row, plus the full row as a fallback (legal since it equals the full dim).
    lt_cands = [t for t in range(_LANE_QUANTUM, w_total + 1, _LANE_QUANTUM)
                if w_total % t == 0]
    if w_total not in lt_cands:
        lt_cands.append(w_total)

    feasible = [(bt, lt) for bt in bt_cands for lt in lt_cands
                if bt * lt <= max_block_elems]
    if not feasible:
        # TODO(synk): no channel-aligned tiling fits the VMEM budget for this
        # shape; fall back to the smallest legal block (may spill).  A masked
        # tail tile would be needed to do better.
        return min(bt_cands), min(lt_cands)

    # Prefer >= 2 batch blocks (batch axis is "parallel" -> v7x's two
    # TensorCores each stream half the HBM bytes) as long as blocks stay
    # >= ~512 KiB, which keeps v5e/v6e at ~85%+ of their HBM roofline.
    split = [c for c in feasible
             if (B // c[0]) >= 2 and c[0] * c[1] >= _MIN_SPLIT_ELEMS]
    pool = split if split else feasible
    return max(pool, key=lambda c: c[0] * c[1])


# --------------------------------------------------------------------------
# Public entry point
# --------------------------------------------------------------------------
def yolo_loss(pred, target, *, feature_length, l_coord, l_noobj,
              max_block_bytes=None):
    """pred, target: (B, H, W, 3) float32 — same axis convention as the nn.Module."""
    B, H, W, C = pred.shape
    assert C == 3 and target.shape == pred.shape
    w_total = H * W * C

    # Free (contiguous) reshape — no transpose, no extra HBM pass.  The lane
    # axis interleaves [conf, loc, cls] per cell.
    pred2 = pred.reshape(B, w_total).astype(jnp.float32)
    tgt2 = target.reshape(B, w_total).astype(jnp.float32)

    try:
        vmem_cap = int(pltpu.get_tpu_info().vmem_capacity_bytes)
    except Exception:  # pragma: no cover - conservative fallback (v7x per-TC)
        vmem_cap = 64 * 1024 * 1024
    cap_bytes = max(vmem_cap // 16, _LANE_QUANTUM * 4)
    if max_block_bytes is not None:
        cap_bytes = min(cap_bytes, int(max_block_bytes))
    max_block_elems = max(cap_bytes // 4, 1)

    total_elems = B * w_total
    feat = float(feature_length)

    # ---------------- Fast path: one block, one device op -----------------
    if total_elems <= max_block_elems and total_elems * 4 <= _FAST_PATH_MAX_BYTES:
        m0, a, b = _lane_consts(w_total, l_coord, l_noobj)
        block_bytes = total_elems * 4
        kernel = functools.partial(_yolo_loss_single_kernel, feature_length=feat)
        out = pl.pallas_call(
            kernel,
            grid=(1,),
            out_shape=jax.ShapeDtypeStruct((1, 1), jnp.float32),
            in_specs=[
                pl.BlockSpec((B, w_total), lambda i: (0, 0)),
                pl.BlockSpec((B, w_total), lambda i: (0, 0)),
                pl.BlockSpec((1, w_total), lambda i: (0, 0)),
                pl.BlockSpec((1, w_total), lambda i: (0, 0)),
                pl.BlockSpec((1, w_total), lambda i: (0, 0)),
            ],
            out_specs=pl.BlockSpec((1, 1), lambda i: (0, 0),
                                   memory_space=pltpu.MemorySpace.SMEM),
            compiler_params=pltpu.CompilerParams(
                dimension_semantics=("arbitrary",),
                vmem_limit_bytes=_vmem_limit(block_bytes, vmem_cap)),
            cost_estimate=pl.CostEstimate(
                flops=14 * total_elems, transcendentals=0,
                bytes_accessed=2 * total_elems * 4 + 3 * w_total * 4 + 4),
        )(pred2, tgt2, m0, a, b)
        return out[0, 0]

    # ---------------- Tiled path: pipelined grid + tiny epilogue ----------
    bt, lt = _pick_tiles(B, w_total, max_block_elems)
    grid_b, grid_l = B // bt, w_total // lt
    m0, a, b = _lane_consts(lt, l_coord, l_noobj)
    block_bytes = bt * lt * 4

    sums, ns = pl.pallas_call(
        _yolo_loss_tiled_kernel,
        grid=(grid_b, grid_l),
        out_shape=(jax.ShapeDtypeStruct((grid_b, 1), jnp.float32),
                   jax.ShapeDtypeStruct((grid_b, 1), jnp.float32)),
        in_specs=[
            pl.BlockSpec((bt, lt), lambda bi, li: (bi, li)),
            pl.BlockSpec((bt, lt), lambda bi, li: (bi, li)),
            pl.BlockSpec((1, lt), lambda bi, li: (0, 0)),   # stays resident
            pl.BlockSpec((1, lt), lambda bi, li: (0, 0)),
            pl.BlockSpec((1, lt), lambda bi, li: (0, 0)),
        ],
        out_specs=(
            pl.BlockSpec((1, 1), lambda bi, li: (bi, 0),
                         memory_space=pltpu.MemorySpace.SMEM),
            pl.BlockSpec((1, 1), lambda bi, li: (bi, 0),
                         memory_space=pltpu.MemorySpace.SMEM),
        ),
        scratch_shapes=[pltpu.VMEM((bt, 1), jnp.float32),
                        pltpu.VMEM((bt, 1), jnp.float32)],
        compiler_params=pltpu.CompilerParams(
            dimension_semantics=("parallel", "arbitrary"),
            vmem_limit_bytes=_vmem_limit(block_bytes, vmem_cap)),
        cost_estimate=pl.CostEstimate(
            flops=14 * total_elems, transcendentals=0,
            bytes_accessed=2 * total_elems * 4 + 3 * lt * 4 + 2 * grid_b * 4),
    )(pred2, tgt2, m0, a, b)

    n_sel = jnp.sum(ns)
    # TODO(synk): n_sel == 0 divides by zero (NaN/Inf), matching the reference.
    return jnp.sum(sums) / (feat * n_sel)


# --------------------------------------------------------------------------
# Pure-JAX reference (mirrors the PyTorch forward via the mask formulation)
# --------------------------------------------------------------------------
def _yolo_loss_ref(pred, target, *, feature_length, l_coord, l_noobj):
    B = pred.shape[0]
    bsel = (jnp.max(target.reshape(B, -1), axis=1) > 0.5).astype(jnp.float32)
    n_sel = jnp.sum(bsel)
    bsel = bsel[:, None, None]
    coo = (target[..., 0] > 0.5).astype(jnp.float32)
    noo = (target[..., 0] < 0.5).astype(jnp.float32)
    d = (pred - target) ** 2
    no_obj = jnp.sum(bsel * noo * d[..., 0])
    c_l = jnp.sum(bsel * coo * d[..., 0])
    loc_l = jnp.sum(bsel * coo * d[..., 1])
    cls_l = jnp.sum(bsel * coo * d[..., 2])
    return (l_noobj * no_obj + c_l + cls_l + l_coord * loc_l) / (feature_length * n_sel)


if __name__ == "__main__":
    feature_length, l_coord, l_noobj = 16, 5.0, 0.5
    root = jax.random.PRNGKey(0)
    key_a, key_b = jax.random.split(root, 2)

    def make_inputs(key, B, H, W):
        k1, k2, k3 = jax.random.split(key, 3)
        pred = jax.random.uniform(k1, (B, H, W, 3), dtype=jnp.float32)
        # Sparse objectness in channel 0 (YOLO-style target), random loc/class.
        obj = (jax.random.uniform(k2, (B, H, W, 1)) > 0.85).astype(jnp.float32)
        rest = jax.random.uniform(k3, (B, H, W, 2), dtype=jnp.float32)
        return pred, jnp.concatenate([obj, rest], axis=-1)

    kw = dict(feature_length=feature_length, l_coord=l_coord, l_noobj=l_noobj)

    # Case 1: small YOLO shape -> fully fused single-block fast path.
    pred, target = make_inputs(key_a, 2, 16, 16)
    ref = _yolo_loss_ref(pred, target, **kw)
    loss = jax.block_until_ready(yolo_loss(pred, target, **kw))
    assert jnp.allclose(loss, ref, rtol=1e-5, atol=1e-5), (loss, ref)

    # Case 2: same shape, forced tiny blocks -> lane-tiled accumulator path
    # (also exercises the pltpu.roll wrap-around at tile edges).
    loss_tiled = jax.block_until_ready(
        yolo_loss(pred, target, max_block_bytes=2 * 384 * 4, **kw))
    assert jnp.allclose(loss_tiled, ref, rtol=1e-5, atol=1e-5), (loss_tiled, ref)

    # Case 3: larger batch, forced batch tiling -> 2 "parallel" batch blocks
    # with per-batch-tile partial loss / count + tiny epilogue.
    pred3, target3 = make_inputs(key_b, 16, 8, 8)
    ref3 = _yolo_loss_ref(pred3, target3, **kw)
    loss3 = jax.block_until_ready(
        yolo_loss(pred3, target3, max_block_bytes=8 * 8 * 8 * 3 * 4, **kw))
    assert jnp.allclose(loss3, ref3, rtol=1e-5, atol=1e-5), (loss3, ref3)

    print("KERNEL_OK")
</pallas_src>

<mosaic_0001>
module attributes {stable_mosaic.version = 11 : i64} {
  func.func @_yolo_loss_single_kernel(%arg0: i32, %arg1: memref<2x768xf32, #tpu.memory_space<vmem>>, %arg2: memref<2x768xf32, #tpu.memory_space<vmem>>, %arg3: memref<1x768xf32, #tpu.memory_space<vmem>>, %arg4: memref<1x768xf32, #tpu.memory_space<vmem>>, %arg5: memref<1x768xf32, #tpu.memory_space<vmem>>, %arg6: memref<1x1xf32, #tpu.memory_space<smem>>) attributes {dimension_semantics = [#tpu.dimension_semantics<arbitrary>], iteration_bounds = array<i64: 1>, scalar_prefetch = 0 : i64, scratch_operands = 0 : i64, tpu.core_type = #tpu.core_type<tc>, window_params = [{pipeline_mode = #tpu.pipeline_mode<synchronous>, transform_indices = @transform_0, window_bounds = array<i64: 2, 768>}, {pipeline_mode = #tpu.pipeline_mode<synchronous>, transform_indices = @transform_1, window_bounds = array<i64: 2, 768>}, {pipeline_mode = #tpu.pipeline_mode<synchronous>, transform_indices = @transform_2, window_bounds = array<i64: 1, 768>}, {pipeline_mode = #tpu.pipeline_mode<synchronous>, transform_indices = @transform_3, window_bounds = array<i64: 1, 768>}, {pipeline_mode = #tpu.pipeline_mode<synchronous>, transform_indices = @transform_4, window_bounds = array<i64: 1, 768>}, {transform_indices = @transform_5, window_bounds = array<i64: 1, 1>}]} {
    %c0 = arith.constant 0 : index
    %c0_0 = arith.constant 0 : index
    %0 = vector.load %arg1[%c0, %c0_0] : memref<2x768xf32, #tpu.memory_space<vmem>>, vector<2x768xf32>
    %c0_1 = arith.constant 0 : index
    %c0_2 = arith.constant 0 : index
    %1 = vector.load %arg2[%c0_1, %c0_2] : memref<2x768xf32, #tpu.memory_space<vmem>>, vector<2x768xf32>
    %c0_3 = arith.constant 0 : index
    %c0_4 = arith.constant 0 : index
    %2 = vector.load %arg3[%c0_3, %c0_4] : memref<1x768xf32, #tpu.memory_space<vmem>>, vector<1x768xf32>
    %c0_5 = arith.constant 0 : index
    %c0_6 = arith.constant 0 : index
    %3 = vector.load %arg4[%c0_5, %c0_6] : memref<1x768xf32, #tpu.memory_space<vmem>>, vector<1x768xf32>
    %c0_7 = arith.constant 0 : index
    %c0_8 = arith.constant 0 : index
    %4 = vector.load %arg5[%c0_7, %c0_8] : memref<1x768xf32, #tpu.memory_space<vmem>>, vector<1x768xf32>
    %5 = vector.broadcast %2 : vector<1x768xf32> to vector<2x768xf32>
    %6 = arith.mulf %1, %5 : vector<2x768xf32>
    %c1_i32 = arith.constant 1 : i32
    %7 = tpu.dynamic_rotate %6 by %c1_i32 dim 1 : vector<2x768xf32>, i32 -> vector<2x768xf32>
    %8 = arith.addf %6, %7 : vector<2x768xf32>
    %c2_i32 = arith.constant 2 : i32
    %9 = tpu.dynamic_rotate %6 by %c2_i32 dim 1 : vector<2x768xf32>, i32 -> vector<2x768xf32>
    %10 = arith.addf %8, %9 : vector<2x768xf32>
    %cst = arith.constant 5.000000e-01 : f32
    %11 = vector.broadcast %cst : f32 to vector<2x768xf32>
    %12 = arith.cmpf ogt, %10, %11 : vector<2x768xf32>
    %13 = arith.extui %12 : vector<2x768xi1> to vector<2x768xi32>
    %14 = arith.sitofp %13 : vector<2x768xi32> to vector<2x768xf32>
    %cst_9 = arith.constant 5.000000e-01 : f32
    %15 = vector.broadcast %cst_9 : f32 to vector<2x768xf32>
    %16 = arith.cmpf olt, %10, %15 : vector<2x768xf32>
    %17 = arith.extui %16 : vector<2x768xi1> to vector<2x768xi32>
    %18 = arith.sitofp %17 : vector<2x768xi32> to vector<2x768xf32>
    %19 = vector.broadcast %3 : vector<1x768xf32> to vector<2x768xf32>
    %20 = arith.mulf %14, %19 : vector<2x768xf32>
    %21 = vector.broadcast %4 : vector<1x768xf32> to vector<2x768xf32>
    %22 = arith.mulf %18, %21 : vector<2x768xf32>
    %23 = arith.addf %20, %22 : vector<2x768xf32>
    %24 = arith.subf %0, %1 : vector<2x768xf32>
    %25 = arith.mulf %24, %24 : vector<2x768xf32>
    %26 = arith.mulf %23, %25 : vector<2x768xf32>
    %cst_10 = arith.constant dense<0.000000e+00> : vector<2xf32>
    %27 = vector.multi_reduction <add>, %26, %cst_10 [1] : vector<2x768xf32> to vector<2xf32>
    %28 = vector.shape_cast %27 : vector<2xf32> to vector<2x1xf32>
    %cst_11 = arith.constant dense<0xFF800000> : vector<2xf32>
    %29 = vector.multi_reduction <maximumf>, %1, %cst_11 [1] : vector<2x768xf32> to vector<2xf32>
    %30 = vector.shape_cast %29 : vector<2xf32> to vector<2x1xf32>
    %cst_12 = arith.constant 5.000000e-01 : f32
    %31 = vector.broadcast %cst_12 : f32 to vector<2x1xf32>
    %32 = arith.cmpf ogt, %30, %31 : vector<2x1xf32>
    %33 = arith.extui %32 : vector<2x1xi1> to vector<2x1xi32>
    %34 = arith.sitofp %33 : vector<2x1xi32> to vector<2x1xf32>
    %35 = vector.shape_cast %34 : vector<2x1xf32> to vector<1x2x1xf32>
    %cst_13 = arith.constant dense<0.000000e+00> : vector<1xf32>
    %36 = vector.multi_reduction <add>, %35, %cst_13 [1, 2] : vector<1x2x1xf32> to vector<1xf32>
    %37 = vector.shape_cast %36 : vector<1xf32> to vector<1x1x1xf32>
    %38 = vector.extract %37[0, 0, 0] : f32 from vector<1x1x1xf32>
    %39 = arith.mulf %34, %28 : vector<2x1xf32>
    %40 = vector.shape_cast %39 : vector<2x1xf32> to vector<1x2x1xf32>
    %cst_14 = arith.constant dense<0.000000e+00> : vector<1xf32>
    %41 = vector.multi_reduction <add>, %40, %cst_14 [1, 2] : vector<1x2x1xf32> to vector<1xf32>
    %42 = vector.shape_cast %41 : vector<1xf32> to vector<1x1x1xf32>
    %43 = vector.extract %42[0, 0, 0] : f32 from vector<1x1x1xf32>
    %cst_15 = arith.constant 1.600000e+01 : f32
    %44 = arith.mulf %cst_15, %38 : f32
    %45 = arith.divf %43, %44 : f32
    %c0_16 = arith.constant 0 : index
    %c0_17 = arith.constant 0 : index
    %46 = memref.load %arg6[%c0_16, %c0_17] : memref<1x1xf32, #tpu.memory_space<smem>>
    memref.store %45, %arg6[%c0_16, %c0_17] : memref<1x1xf32, #tpu.memory_space<smem>>
    return
  }
  func.func @transform_0(%arg0: i32) -> (i32, i32) {
    %c0_i32 = arith.constant 0 : i32
    %c0_i32_0 = arith.constant 0 : i32
    %c0_i32_1 = arith.constant 0 : i32
    return %c0_i32, %c0_i32_0 : i32, i32
  }
  func.func @transform_1(%arg0: i32) -> (i32, i32) {
    %c0_i32 = arith.constant 0 : i32
    %c0_i32_0 = arith.constant 0 : i32
    %c0_i32_1 = arith.constant 0 : i32
    return %c0_i32, %c0_i32_0 : i32, i32
  }
  func.func @transform_2(%arg0: i32) -> (i32, i32) {
    %c0_i32 = arith.constant 0 : i32
    %c0_i32_0 = arith.constant 0 : i32
    %c0_i32_1 = arith.constant 0 : i32
    return %c0_i32, %c0_i32_0 : i32, i32
  }
  func.func @transform_3(%arg0: i32) -> (i32, i32) {
    %c0_i32 = arith.constant 0 : i32
    %c0_i32_0 = arith.constant 0 : i32
    %c0_i32_1 = arith.constant 0 : i32
    return %c0_i32, %c0_i32_0 : i32, i32
  }
  func.func @transform_4(%arg0: i32) -> (i32, i32) {
    %c0_i32 = arith.constant 0 : i32
    %c0_i32_0 = arith.constant 0 : i32
    %c0_i32_1 = arith.constant 0 : i32
    return %c0_i32, %c0_i32_0 : i32, i32
  }
  func.func @transform_5(%arg0: i32) -> (i32, i32) {
    %c0_i32 = arith.constant 0 : i32
    %c0_i32_0 = arith.constant 0 : i32
    %c0_i32_1 = arith.constant 0 : i32
    return %c0_i32, %c0_i32_0 : i32, i32
  }
}

</mosaic_0001>

<llo_original>
// kernel: tpu_custom_call.1
$region0: #{tpu_custom_call.1}
  #allocation0 [shape = 'u32[]', space=smem, size = 0x4, offset = 0x4, fixed_abs, tag = 'smem constant byte address 0x4 - core index']
  #allocation1 [shape = 'u32[144,128]{1,0:T(1,128)}', space=vmem, size = 0x12000, scoped, tag = 'internal scratch']
  %s0 = inlined_call_operand.hbm [shape: f32[2,768], index: 0, kind: input, shape index: {}]
  %s1 = inlined_call_operand.hbm [shape: f32[2,768], index: 1, kind: input, shape index: {}]
  %s2 = inlined_call_operand.hbm [shape: f32[1,768], index: 2, kind: input, shape index: {}]
  %s3 = inlined_call_operand.hbm [shape: f32[1,768], index: 3, kind: input, shape index: {}]
  %s4 = inlined_call_operand.vmem [shape: f32[1,768], index: 4, kind: input, shape index: {}]
  %s5 = inlined_call_operand.hbm [shape: f32[1,1], index: 5, kind: output, shape index: {}]
  %s6 = sld [smem:[#allocation0]]
  $region46: #{tpu_custom_call.1} parent=0
    _
  %s8 = ssub.s32 1, %s6
  %s9 = scalar_select 0, %s8, %s6
  $region1: #{tpu_custom_call.1} parent=0
    #allocation2 [shape = 'u8[6144]{0}', space=vmem, size = 0x1800, scoped, tag = 'input window, operand 0, single buffered']
    #allocation3 [shape = 's32[1]{0}', space=sflag, size = 0x4, scoped, tag = 'scoped memory for tpu_custom_call.1']
    #allocation4 [shape = 's32[1]{0}', space=sflag, size = 0x4, scoped, tag = 'scoped memory for tpu_custom_call.1']
    #allocation5 [shape = 'u8[6144]{0}', space=vmem, size = 0x1800, scoped, tag = 'input window, operand 1, single buffered']
    #allocation6 [shape = 's32[1]{0}', space=sflag, size = 0x4, scoped, tag = 'scoped memory for tpu_custom_call.1']
    #allocation7 [shape = 'u8[3072]{0}', space=vmem, size = 0xc00, scoped, tag = 'input window, operand 2, single buffered']
    #allocation8 [shape = 'u8[3072]{0}', space=vmem, size = 0xc00, scoped, tag = 'input window, operand 3, single buffered']
    #allocation9 [shape = 's32[1]{0}', space=sflag, size = 0x4, scoped, tag = 'scoped memory for tpu_custom_call.1']
    #allocation10 [shape = 'u8[512]{0}', space=smem, size = 0x200, scoped, tag = 'output window, operand 0, single buffered']
    %10 = vsyncpa [#allocation3], 0
    %11 = vsyncpa [#allocation6], 0
    %12 = vsyncpa [#allocation9], 0
    %13 = vsyncpa [#allocation4], 0
    // Predicated region
    $region2: #{tpu_custom_call.1} parent=1 // pred_check
      _
    $region3: #{tpu_custom_call.1} parent=1 // pred_check_branch
      %15 = sbr.rel (0) target = $region5
    $region4: #{tpu_custom_call.1} parent=1 // pred_region
      %s17 = ssub.s32 192, 192
      %18 = vsyncadd [#allocation3], %s17
      %s20 = sshll.u32 [#allocation2], 4
      %s21 = int_to_ptr.vmem [resolvable:$true] %s20
      %23 = dma.hbm_to_vmem [thread:$0]  %s0, 192, %s21, [#allocation3]
    $region5: #{tpu_custom_call.1} parent=1 // pred_fallthru
      _
    // Predicated region
    $region6: #{tpu_custom_call.1} parent=1 // pred_check
      _
    $region7: #{tpu_custom_call.1} parent=1 // pred_check_branch
      %25 = sbr.rel (0) target = $region9
    $region8: #{tpu_custom_call.1} parent=1 // pred_region
      %s27 = ssub.s32 192, 192
      %28 = vsyncadd [#allocation6], %s27
      %s30 = sshll.u32 [#allocation5], 4
      %s31 = int_to_ptr.vmem [resolvable:$true] %s30
      %33 = dma.hbm_to_vmem [thread:$0]  %s1, 192, %s31, [#allocation6]
    $region9: #{tpu_custom_call.1} parent=1 // pred_fallthru
      _
    // Predicated region
    $region10: #{tpu_custom_call.1} parent=1 // pred_check
      _
    $region11: #{tpu_custom_call.1} parent=1 // pred_check_branch
      %35 = sbr.rel (0) target = $region13
    $region12: #{tpu_custom_call.1} parent=1 // pred_region
      %s37 = ssub.s32 96, 96
      %38 = vsyncadd [#allocation6], %s37
      %s40 = sshll.u32 [#allocation7], 4
      %s41 = int_to_ptr.vmem [resolvable:$true] %s40
      %43 = dma.hbm_to_vmem [thread:$0]  %s2, 96, %s41, [#allocation6]
    $region13: #{tpu_custom_call.1} parent=1 // pred_fallthru
      _
    // Predicated region
    $region14: #{tpu_custom_call.1} parent=1 // pred_check
      _
    $region15: #{tpu_custom_call.1} parent=1 // pred_check_branch
      %45 = sbr.rel (0) target = $region17
    $region16: #{tpu_custom_call.1} parent=1 // pred_region
      %s47 = ssub.s32 96, 96
      %48 = vsyncadd [#allocation9], %s47
      %s50 = sshll.u32 [#allocation8], 4
      %s51 = int_to_ptr.vmem [resolvable:$true] %s50
      %53 = dma.hbm_to_vmem [thread:$0]  %s3, 96, %s51, [#allocation9]
    $region17: #{tpu_custom_call.1} parent=1 // pred_fallthru
      _
    // Predicated region
    $region18: #{tpu_custom_call.1} parent=1 // pred_check
      _
    $region19: #{tpu_custom_call.1} parent=1 // pred_check_branch
      %55 = sbr.rel (0) target = $region21
    $region20: #{tpu_custom_call.1} parent=1 // pred_region
      _
    $region21: #{tpu_custom_call.1} parent=1 // pred_fallthru
      _
    // Predicated region
    $region22: #{tpu_custom_call.1} parent=1 // pred_check
      _
    $region23: #{tpu_custom_call.1} parent=1 // pred_check_branch
      %57 = sbr.rel (0) target = $region25
    $region24: #{tpu_custom_call.1} parent=1 // pred_region
      %58 = dma.done [#allocation3], 192
    $region25: #{tpu_custom_call.1} parent=1 // pred_fallthru
      _
    // Predicated region
    $region26: #{tpu_custom_call.1} parent=1 // pred_check
      _
    $region27: #{tpu_custom_call.1} parent=1 // pred_check_branch
      %60 = sbr.rel (0) target = $region29
    $region28: #{tpu_custom_call.1} parent=1 // pred_region
      %61 = dma.done [#allocation6], 192
    $region29: #{tpu_custom_call.1} parent=1 // pred_fallthru
      _
    // Predicated region
    $region30: #{tpu_custom_call.1} parent=1 // pred_check
      _
    $region31: #{tpu_custom_call.1} parent=1 // pred_check_branch
      %63 = sbr.rel (0) target = $region33
    $region32: #{tpu_custom_call.1} parent=1 // pred_region
      %64 = dma.done [#allocation6], 96
    $region33: #{tpu_custom_call.1} parent=1 // pred_fallthru
      _
    // Predicated region
    $region34: #{tpu_custom_call.1} parent=1 // pred_check
      _
    $region35: #{tpu_custom_call.1} parent=1 // pred_check_branch
      %66 = sbr.rel (0) target = $region37
    $region36: #{tpu_custom_call.1} parent=1 // pred_region
      %67 = dma.done [#allocation9], 96
    $region37: #{tpu_custom_call.1} parent=1 // pred_fallthru
      _
    %v68 = vld [vmem:[#allocation2] sm:$0xff]
    %v69 = vld [vmem:[#allocation2 + $0x8] sm:$0xf]
    %v70 = vld [vmem:[#allocation5] sm:$0xff]
    %v71 = vld [vmem:[#allocation5 + $0x8] sm:$0xf]
    %v72 = vld [vmem:[#allocation7] sm:$0x3f]
    %v73 = vld [vmem:[#allocation8] sm:$0x3f]
    %v74 = vld [vmem:[%s4] sm:$0x3f]
    %v76 = vlaneseq
    %v77 = vshrl.u32 %v76, 7
    %v78 = vsub.s32 0, %v77
    %v79 = vrot.slane %v72, %v78
    %v80 = vlaneseq
    %v81 = vshrl.u32 %v80, 7
    %v82 = vsub.s32 1, %v81
    %v83 = vrot.slane %v72, %v82
    %v84 = vlaneseq
    %v85 = vshrl.u32 %v84, 7
    %v86 = vsub.s32 2, %v85
    %v87 = vrot.slane %v72, %v86
    %v88 = vlaneseq
    %v89 = vshrl.u32 %v88, 7
    %v90 = vsub.s32 3, %v89
    %v91 = vrot.slane %v72, %v90
    %v92 = vlaneseq
    %v93 = vshrl.u32 %v92, 7
    %v94 = vsub.s32 4, %v93
    %v95 = vrot.slane %v72, %v94
    %v96 = vlaneseq
    %v97 = vshrl.u32 %v96, 7
    %v98 = vsub.s32 5, %v97
    %v99 = vrot.slane %v72, %v98
    %v100 = vcombine.low %v79, %v83
    %v101 = vcombine.low %v87, %v91
    %v103 = vunpack.c.l.s4 1983009808
    %v104 = vunpack.c.0.s8 %v103
    %v105 = vlaneseq
    %v106 = vshrl.u32 %v105, 7
    %v107 = vsub.s32 %v104, %v106
    %v108 = vrot.slane %v100, %v107
    %v110 = vunpack.c.l.s4 1983009808
    %v111 = vunpack.c.0.s8 %v110
    %v112 = vlaneseq
    %v113 = vshrl.u32 %v112, 7
    %v114 = vsub.s32 %v111, %v113
    %v115 = vrot.slane %v101, %v114
    %v116 = vcombine.low %v108, %v115
    %v117 = vcombine.low %v95, %v99
    %v119 = vunpack.c.l.s4 1983009808
    %v120 = vunpack.c.0.s8 %v119
    %v121 = vlaneseq
    %v122 = vshrl.u32 %v121, 7
    %v123 = vsub.s32 %v120, %v122
    %v124 = vrot.slane %v117, %v123
    %v127 = vmul.f32 %v70, %v116
    %v128 = vmul.f32 %v71, %v124
    %v131 = vcombine.high %v127, %v127
    %v133 = vunpack.c.l.s4 1983009808
    %v134 = vunpack.c.0.s8 %v133
    %v135 = vlaneseq
    %v136 = vshrl.u32 %v135, 7
    %v137 = vsub.s32 %v134, %v136
    %v138 = vrot.slane %v127, %v137
    %v140 = vunpack.c.l.s4 1983009808
    %v141 = vunpack.c.0.s8 %v140
    %v142 = vlaneseq
    %v143 = vshrl.u32 %v142, 7
    %v144 = vsub.s32 %v141, %v143
    %v145 = vrot.slane %v131, %v144
    %v146 = vcombine.high %v138, %v138
    %v147 = vcombine.high %v145, %v145
    %v149 = vunpack.c.l.s4 1983009808
    %v150 = vunpack.c.0.s8 %v149
    %v151 = vlaneseq
    %v152 = vshrl.u32 %v151, 7
    %v153 = vsub.s32 %v150, %v152
    %v154 = vrot.slane %v128, %v153
    %v155 = vcombine.high %v154, %v154
    %162 = vrot.lane.b32.xlu0 %v138, 1
    %v163 = vpop.permute.xlu0 %162
    %164 = vrot.lane.b32.xlu0 %v146, 1
    %v165 = vpop.permute.xlu0 %164
    %166 = vrot.lane.b32.xlu0 %v145, 1
    %v167 = vpop.permute.xlu0 %166
    %168 = vrot.lane.b32.xlu0 %v147, 1
    %v169 = vpop.permute.xlu0 %168
    %170 = vrot.lane.b32.xlu0 %v154, 1
    %v171 = vpop.permute.xlu0 %170
    %172 = vrot.lane.b32.xlu0 %v155, 1
    %v173 = vpop.permute.xlu0 %172
    %v174 = vlaneseq
    %v175 = vand.u32 %v174, 127
    %vm176 = vcmp.lt.s32.totalorder %v175, 1
    %v177 = vsel %vm176, %v171, %v173
    %v178 = vsel %vm176, %v169, %v171
    %v179 = vsel %vm176, %v167, %v169
    %v180 = vsel %vm176, %v165, %v167
    %v181 = vsel %vm176, %v163, %v165
    %v182 = vsel %vm176, %v173, %v163
    %v189 = vcombine.low %v182, %v181
    %v190 = vcombine.low %v180, %v179
    %v192 = vunpack.c.l.s4 1983009808
    %v193 = vunpack.c.0.s8 %v192
    %v194 = vlaneseq
    %v195 = vshrl.u32 %v194, 7
    %v196 = vsub.s32 %v193, %v195
    %v197 = vrot.slane %v189, %v196
    %v199 = vunpack.c.l.s4 1983009808
    %v200 = vunpack.c.0.s8 %v199
    %v201 = vlaneseq
    %v202 = vshrl.u32 %v201, 7
    %v203 = vsub.s32 %v200, %v202
    %v204 = vrot.slane %v190, %v203
    %v205 = vcombine.low %v197, %v204
    %v206 = vcombine.low %v178, %v177
    %v208 = vunpack.c.l.s4 1983009808
    %v209 = vunpack.c.0.s8 %v208
    %v210 = vlaneseq
    %v211 = vshrl.u32 %v210, 7
    %v212 = vsub.s32 %v209, %v211
    %v213 = vrot.slane %v206, %v212
    %v216 = vadd.f32 %v127, %v205
    %v217 = vadd.f32 %v128, %v213
    %218 = vrot.lane.b32.xlu0 %v138, 2
    %v219 = vpop.permute.xlu0 %218
    %220 = vrot.lane.b32.xlu0 %v146, 2
    %v221 = vpop.permute.xlu0 %220
    %222 = vrot.lane.b32.xlu0 %v145, 2
    %v223 = vpop.permute.xlu0 %222
    %224 = vrot.lane.b32.xlu0 %v147, 2
    %v225 = vpop.permute.xlu0 %224
    %226 = vrot.lane.b32.xlu0 %v154, 2
    %v227 = vpop.permute.xlu0 %226
    %228 = vrot.lane.b32.xlu0 %v155, 2
    %v229 = vpop.permute.xlu0 %228
    %vm230 = vcmp.lt.s32.totalorder %v175, 2
    %v231 = vsel %vm230, %v227, %v229
    %v232 = vsel %vm230, %v225, %v227
    %v233 = vsel %vm230, %v223, %v225
    %v234 = vsel %vm230, %v221, %v223
    %v235 = vsel %vm230, %v219, %v221
    %v236 = vsel %vm230, %v229, %v219
    %v243 = vcombine.low %v236, %v235
    %v244 = vcombine.low %v234, %v233
    %v246 = vunpack.c.l.s4 1983009808
    %v247 = vunpack.c.0.s8 %v246
    %v248 = vlaneseq
    %v249 = vshrl.u32 %v248, 7
    %v250 = vsub.s32 %v247, %v249
    %v251 = vrot.slane %v243, %v250
    %v253 = vunpack.c.l.s4 1983009808
    %v254 = vunpack.c.0.s8 %v253
    %v255 = vlaneseq
    %v256 = vshrl.u32 %v255, 7
    %v257 = vsub.s32 %v254, %v256
    %v258 = vrot.slane %v244, %v257
    %v259 = vcombine.low %v251, %v258
    %v260 = vcombine.low %v232, %v231
    %v262 = vunpack.c.l.s4 1983009808
    %v263 = vunpack.c.0.s8 %v262
    %v264 = vlaneseq
    %v265 = vshrl.u32 %v264, 7
    %v266 = vsub.s32 %v263, %v265
    %v267 = vrot.slane %v260, %v266
    %v270 = vadd.f32 %v216, %v259
    %v271 = vadd.f32 %v217, %v267
    %vm272 = vcmp.gt.f32.partialorder %v270, 0.5
    %vm273 = vcmp.gt.f32.partialorder %v271, 0.5
    %v274 = vsel %vm272, 1, 0
    %v275 = vsel %vm273, 1, 0
    %v276 = vcvt.s32.f32 %v274
    %v277 = vcvt.s32.f32 %v275
    %vm278 = vcmp.lt.f32.partialorder %v270, 0.5
    %vm279 = vcmp.lt.f32.partialorder %v271, 0.5
    %v280 = vsel %vm278, 1, 0
    %v281 = vsel %vm279, 1, 0
    %v282 = vcvt.s32.f32 %v280
    %v283 = vcvt.s32.f32 %v281
    %v285 = vlaneseq
    %v286 = vshrl.u32 %v285, 7
    %v287 = vsub.s32 0, %v286
    %v288 = vrot.slane %v73, %v287
    %v289 = vlaneseq
    %v290 = vshrl.u32 %v289, 7
    %v291 = vsub.s32 1, %v290
    %v292 = vrot.slane %v73, %v291
    %v293 = vlaneseq
    %v294 = vshrl.u32 %v293, 7
    %v295 = vsub.s32 2, %v294
    %v296 = vrot.slane %v73, %v295
    %v297 = vlaneseq
    %v298 = vshrl.u32 %v297, 7
    %v299 = vsub.s32 3, %v298
    %v300 = vrot.slane %v73, %v299
    %v301 = vlaneseq
    %v302 = vshrl.u32 %v301, 7
    %v303 = vsub.s32 4, %v302
    %v304 = vrot.slane %v73, %v303
    %v305 = vlaneseq
    %v306 = vshrl.u32 %v305, 7
    %v307 = vsub.s32 5, %v306
    %v308 = vrot.slane %v73, %v307
    %v309 = vcombine.low %v288, %v292
    %v310 = vcombine.low %v296, %v300
    %v312 = vunpack.c.l.s4 1983009808
    %v313 = vunpack.c.0.s8 %v312
    %v314 = vlaneseq
    %v315 = vshrl.u32 %v314, 7
    %v316 = vsub.s32 %v313, %v315
    %v317 = vrot.slane %v309, %v316
    %v319 = vunpack.c.l.s4 1983009808
    %v320 = vunpack.c.0.s8 %v319
    %v321 = vlaneseq
    %v322 = vshrl.u32 %v321, 7
    %v323 = vsub.s32 %v320, %v322
    %v324 = vrot.slane %v310, %v323
    %v325 = vcombine.low %v317, %v324
    %v326 = vcombine.low %v304, %v308
    %v328 = vunpack.c.l.s4 1983009808
    %v329 = vunpack.c.0.s8 %v328
    %v330 = vlaneseq
    %v331 = vshrl.u32 %v330, 7
    %v332 = vsub.s32 %v329, %v331
    %v333 = vrot.slane %v326, %v332
    %v336 = vmul.f32 %v276, %v325
    %v337 = vmul.f32 %v277, %v333
    %v339 = vlaneseq
    %v340 = vshrl.u32 %v339, 7
    %v341 = vsub.s32 0, %v340
    %v342 = vrot.slane %v74, %v341
    %v343 = vlaneseq
    %v344 = vshrl.u32 %v343, 7
    %v345 = vsub.s32 1, %v344
    %v346 = vrot.slane %v74, %v345
    %v347 = vlaneseq
    %v348 = vshrl.u32 %v347, 7
    %v349 = vsub.s32 2, %v348
    %v350 = vrot.slane %v74, %v349
    %v351 = vlaneseq
    %v352 = vshrl.u32 %v351, 7
    %v353 = vsub.s32 3, %v352
    %v354 = vrot.slane %v74, %v353
    %v355 = vlaneseq
    %v356 = vshrl.u32 %v355, 7
    %v357 = vsub.s32 4, %v356
    %v358 = vrot.slane %v74, %v357
    %v359 = vlaneseq
    %v360 = vshrl.u32 %v359, 7
    %v361 = vsub.s32 5, %v360
    %v362 = vrot.slane %v74, %v361
    %v363 = vcombine.low %v342, %v346
    %v364 = vcombine.low %v350, %v354
    %v366 = vunpack.c.l.s4 1983009808
    %v367 = vunpack.c.0.s8 %v366
    %v368 = vlaneseq
    %v369 = vshrl.u32 %v368, 7
    %v370 = vsub.s32 %v367, %v369
    %v371 = vrot.slane %v363, %v370
    %v373 = vunpack.c.l.s4 1983009808
    %v374 = vunpack.c.0.s8 %v373
    %v375 = vlaneseq
    %v376 = vshrl.u32 %v375, 7
    %v377 = vsub.s32 %v374, %v376
    %v378 = vrot.slane %v364, %v377
    %v379 = vcombine.low %v371, %v378
    %v380 = vcombine.low %v358, %v362
    %v382 = vunpack.c.l.s4 1983009808
    %v383 = vunpack.c.0.s8 %v382
    %v384 = vlaneseq
    %v385 = vshrl.u32 %v384, 7
    %v386 = vsub.s32 %v383, %v385
    %v387 = vrot.slane %v380, %v386
    %v390 = vmul.f32 %v282, %v379
    %v391 = vmul.f32 %v283, %v387
    %v392 = vadd.f32 %v336, %v390
    %v393 = vadd.f32 %v337, %v391
    %v394 = vsub.f32 %v68, %v70
    %v395 = vsub.f32 %v69, %v71
    %v396 = vmul.f32 %v394, %v394
    %v397 = vmul.f32 %v395, %v395
    %v398 = vmul.f32 %v392, %v396
    %v399 = vmul.f32 %v393, %v397
    %v402 = vcombine.high %v398, %v398
    %v404 = vunpack.c.l.s4 1983009808
    %v405 = vunpack.c.0.s8 %v404
    %v406 = vlaneseq
    %v407 = vshrl.u32 %v406, 7
    %v408 = vsub.s32 %v405, %v407
    %v409 = vrot.slane %v398, %v408
    %v411 = vunpack.c.l.s4 1983009808
    %v412 = vunpack.c.0.s8 %v411
    %v413 = vlaneseq
    %v414 = vshrl.u32 %v413, 7
    %v415 = vsub.s32 %v412, %v414
    %v416 = vrot.slane %v402, %v415
    %v417 = vcombine.high %v409, %v409
    %v418 = vcombine.high %v416, %v416
    %v420 = vunpack.c.l.s4 1983009808
    %v421 = vunpack.c.0.s8 %v420
    %v422 = vlaneseq
    %v423 = vshrl.u32 %v422, 7
    %v424 = vsub.s32 %v421, %v423
    %v425 = vrot.slane %v399, %v424
    %v426 = vcombine.high %v425, %v425
    %vm433 = vcmask 1041408
    %v434 = vsel %vm433, %v409, 0.0
    %v435 = vsel %vm433, %v417, 0.0
    %v436 = vadd.f32 %v434, %v435
    %v437 = vsel %vm433, %v416, 0.0
    %v438 = vadd.f32 %v436, %v437
    %v439 = vsel %vm433, %v418, 0.0
    %v440 = vadd.f32 %v438, %v439
    %v441 = vsel %vm433, %v425, 0.0
    %v442 = vadd.f32 %v440, %v441
    %v443 = vsel %vm433, %v426, 0.0
    %v444 = vadd.f32 %v442, %v443
    %445 = vadd.xlane.f32.xlu0 %v444
    %v446 = vpop.xlane.xlu0 %445
    %v449 = vcombine.high %v70, %v70
    %v451 = vunpack.c.l.s4 1983009808
    %v452 = vunpack.c.0.s8 %v451
    %v453 = vlaneseq
    %v454 = vshrl.u32 %v453, 7
    %v455 = vsub.s32 %v452, %v454
    %v456 = vrot.slane %v70, %v455
    %v458 = vunpack.c.l.s4 1983009808
    %v459 = vunpack.c.0.s8 %v458
    %v460 = vlaneseq
    %v461 = vshrl.u32 %v460, 7
    %v462 = vsub.s32 %v459, %v461
    %v463 = vrot.slane %v449, %v462
    %v464 = vcombine.high %v456, %v456
    %v465 = vcombine.high %v463, %v463
    %v467 = vunpack.c.l.s4 1983009808
    %v468 = vunpack.c.0.s8 %v467
    %v469 = vlaneseq
    %v470 = vshrl.u32 %v469, 7
    %v471 = vsub.s32 %v468, %v470
    %v472 = vrot.slane %v71, %v471
    %v473 = vcombine.high %v472, %v472
    %v480 = vsel %vm433, %v456, -inf
    %v481 = vsel %vm433, %v464, -inf
    %v482 = vsel %vm433, %v463, -inf
    %v483 = vsel %vm433, %v465, -inf
    %v484 = vsel %vm433, %v472, -inf
    %v485 = vmax.f32 %v480, %v484
    %v486 = vsel %vm433, %v473, -inf
    %v487 = vmax.f32 %v481, %v486
    %v488 = vmax.f32 %v485, %v487
    %v489 = vmax.f32 %v482, %v483
    %v490 = vmax.f32 %v488, %v489
    %491 = vmax.xlane.f32.xlu0 %v490
    %v492 = vpop.xlane.xlu0 %491
    %vm493 = vcmp.gt.f32.partialorder %v492, 0.5
    %v494 = vsel %vm493, 1, 0
    %v495 = vcvt.s32.f32 %v494
    %vm496 = vcmask 1024
    %v497 = vsel %vm496, %v495, 0.0
    %498 = vadd.xlane.f32.xlu0 %v497
    %v499 = vpop.xlane.xlu0 %498
    %v500 = vrot.slane %v499, 4
    %v501 = vadd.f32 %v499, %v500
    %v502 = vrot.slane %v501, 2
    %v503 = vadd.f32 %v501, %v502
    %v504 = vrot.slane %v503, 1
    %v505 = vadd.f32 %v503, %v504
    %s506 = vtos %v505
    %v507 = vmul.f32 %v495, %v446
    %v508 = vsel %vm496, %v507, 0.0
    %509 = vadd.xlane.f32.xlu0 %v508
    %v510 = vpop.xlane.xlu0 %509
    %v511 = vrot.slane %v510, 4
    %v512 = vadd.f32 %v510, %v511
    %v513 = vrot.slane %v512, 2
    %v514 = vadd.f32 %v512, %v513
    %v515 = vrot.slane %v514, 1
    %v516 = vadd.f32 %v514, %v515
    %s517 = vtos %v516
    %s518 = smul.f32 %s506, 16.0
    %v519 = vstv %s518
    %v520 = vrcp.pop %v519
    %s521 = vtos %v520
    %s522 = smul.f32 %s517, %s521
    %s523 = scalar_lea.smem [#allocation10], 0
    %524 = sst [smem:[%s523]] %s522
    // Predicated region
    $region38: #{tpu_custom_call.1} parent=1 // pred_check
      _
    $region39: #{tpu_custom_call.1} parent=1 // pred_check_branch
      %526 = sbr.rel (0) target = $region41
    $region40: #{tpu_custom_call.1} parent=1 // pred_region
      %s528 = ssub.s32 16, 16
      %529 = vsyncadd [#allocation4], %s528
      %532 = dma.smem_to_hbm [#allocation10], 16, %s5, [#allocation4]
    $region41: #{tpu_custom_call.1} parent=1 // pred_fallthru
      _
    // Predicated region
    $region42: #{tpu_custom_call.1} parent=1 // pred_check
      _
    $region43: #{tpu_custom_call.1} parent=1 // pred_check_branch
      %534 = sbr.rel (0) target = $region45
    $region44: #{tpu_custom_call.1} parent=1 // pred_region
      %535 = dma.done [#allocation4], 16
    $region45: #{tpu_custom_call.1} parent=1 // pred_fallthru
      _
    %536 = sfence
    %537 = vsyncpa [#allocation3], 1
    %538 = vsyncpa [#allocation6], 1
    %539 = vsyncpa [#allocation9], 1
    %540 = vsyncpa [#allocation4], 1

</llo_original>
